<compile_context>
chip_gen: v6e
topology: v6e:2x2x1
jax: 0.10.0
libtpu: 0.0.40
codegen_flags: <defaults>
</compile_context>

<pallas_src>
import jax
import jax.numpy as jnp
from jax.experimental import pallas as pl
from jax.experimental.pallas import tpu as pltpu


def _make_shuffle_kernel(groups, channels_per_group):
    g = groups
    cpg = channels_per_group
    C = g * cpg

    def kernel(x_ref, o_ref):
        # x_ref / o_ref: (1, C, hw_blk) VMEM tiles.
        # Channel shuffle: out[:, j*g + i, :] = in[:, i*cpg + j, :]
        # Static unroll of single-channel copies; each is a contiguous,
        # lane-dense (1 sublane x hw_blk lanes) VMEM load + store.  No
        # strided / gather ref indexing (rejected by the interpreter).
        for c_out in range(C):
            i = c_out % g
            j = c_out // g
            c_in = i * cpg + j
            o_ref[0, c_out, :] = x_ref[0, c_in, :]

    return kernel


def _pick_hw_block(hw, c, itemsize, target_bytes=4 * 1024 * 1024):
    """Largest lane-dense chunk of the flattened H*W axis whose (C, hw_blk)
    slab stays under `target_bytes`, so double-buffered in+out blocks fit
    comfortably in scoped VMEM on v5e / v6e / v7x."""
    if c * hw * itemsize <= target_bytes:
        return hw
    best = None
    blk = 128
    while blk < hw:
        if hw % blk == 0 and c * blk * itemsize <= target_bytes:
            best = blk
        blk += 128
    return best if best is not None else hw  # fall back to full H*W


def shuffle_block(x, groups):
    """Channel shuffle of an NCHW array, equivalent to the PyTorch ShuffleBlock."""
    N, C, H, W = x.shape
    g = groups
    assert C % g == 0, "C must be divisible by groups"
    cpg = C // g

    if g == 1 or cpg == 1:
        return x  # shuffle is the identity

    hw = H * W
    x3 = x.reshape(N, C, hw)  # free: channel planes are contiguous in NCHW

    hw_blk = _pick_hw_block(hw, C, x.dtype.itemsize)
    n_hw = hw // hw_blk

    spec = pl.BlockSpec((1, C, hw_blk), lambda n, hb: (n, 0, hb))

    out3 = pl.pallas_call(
        _make_shuffle_kernel(g, cpg),
        out_shape=jax.ShapeDtypeStruct((N, C, hw), x.dtype),
        grid_spec=pltpu.PrefetchScalarGridSpec(
            num_scalar_prefetch=0,
            grid=(N, n_hw),
            in_specs=[spec],
            out_specs=spec,
        ),
        compiler_params=pltpu.CompilerParams(
            dimension_semantics=("parallel", "parallel"),
            vmem_limit_bytes=32 * 1024 * 1024,
        ),
    )(x3)

    return out3.reshape(N, C, H, W)


def shuffle_block_reference(x, groups):
    """Pure-JAX reference mirroring the PyTorch view/permute/reshape."""
    N, C, H, W = x.shape
    g = groups
    return (
        x.reshape(N, g, C // g, H, W)
        .transpose(0, 2, 1, 3, 4)
        .reshape(N, C, H, W)
    )


if __name__ == "__main__":
    # ShuffleBlock has no learnable parameters; only `groups` is configured.
    key = jax.random.PRNGKey(0)

    configs = [
        # (N, C, H, W, groups)
        (2, 4, 16, 16, 2),  # H*W = 256: lane-dense 128-multiple path
        (2, 6, 8, 8, 3),    # g=3 path, H*W = 64 (full-dim last block dim)
    ]
    for idx, (N, C, H, W, g) in enumerate(configs):
        key, sub = jax.random.split(key)
        x = jax.random.normal(sub, (N, C, H, W), dtype=jnp.float32)

        out = jax.block_until_ready(shuffle_block(x, g))
        ref = shuffle_block_reference(x, g)

        assert out.shape == (N, C, H, W)
        assert out.dtype == x.dtype
        assert jnp.array_equal(out, ref), f"Pallas channel shuffle mismatch (config {idx})"

    print("KERNEL_OK")
</pallas_src>

<mosaic_0001>
module attributes {stable_mosaic.version = 11 : i64} {
  func.func @kernel(%arg0: i32, %arg1: i32, %arg2: memref<1x4x256xf32, #tpu.memory_space<vmem>>, %arg3: memref<1x4x256xf32, #tpu.memory_space<vmem>>) attributes {dimension_semantics = [#tpu.dimension_semantics<parallel>, #tpu.dimension_semantics<parallel>], iteration_bounds = array<i64: 2, 1>, scalar_prefetch = 0 : i64, scratch_operands = 0 : i64, tpu.core_type = #tpu.core_type<tc>, window_params = [{transform_indices = @transform_0, window_bounds = array<i64: 1, 4, 256>}, {transform_indices = @transform_1, window_bounds = array<i64: 1, 4, 256>}]} {
    %c0 = arith.constant 0 : index
    %c0_0 = arith.constant 0 : index
    %c0_1 = arith.constant 0 : index
    %0 = vector.load %arg2[%c0, %c0_0, %c0_1] : memref<1x4x256xf32, #tpu.memory_space<vmem>>, vector<1x1x256xf32>
    %1 = vector.shape_cast %0 : vector<1x1x256xf32> to vector<256xf32>
    %c0_2 = arith.constant 0 : index
    %c0_3 = arith.constant 0 : index
    %c0_4 = arith.constant 0 : index
    %2 = vector.load %arg3[%c0_2, %c0_3, %c0_4] : memref<1x4x256xf32, #tpu.memory_space<vmem>>, vector<1x1x256xf32>
    %3 = vector.shape_cast %2 : vector<1x1x256xf32> to vector<256xf32>
    %4 = vector.shape_cast %1 : vector<256xf32> to vector<1x1x256xf32>
    tpu.vector_store %arg3[%c0_2, %c0_3, %c0_4], %4 {strides = array<i32>} : memref<1x4x256xf32, #tpu.memory_space<vmem>>, vector<1x1x256xf32>,
    %c0_5 = arith.constant 0 : index
    %c2 = arith.constant 2 : index
    %c0_6 = arith.constant 0 : index
    %5 = vector.load %arg2[%c0_5, %c2, %c0_6] : memref<1x4x256xf32, #tpu.memory_space<vmem>>, vector<1x1x256xf32>
    %6 = vector.shape_cast %5 : vector<1x1x256xf32> to vector<256xf32>
    %c0_7 = arith.constant 0 : index
    %c1 = arith.constant 1 : index
    %c0_8 = arith.constant 0 : index
    %7 = vector.load %arg3[%c0_7, %c1, %c0_8] : memref<1x4x256xf32, #tpu.memory_space<vmem>>, vector<1x1x256xf32>
    %8 = vector.shape_cast %7 : vector<1x1x256xf32> to vector<256xf32>
    %9 = vector.shape_cast %6 : vector<256xf32> to vector<1x1x256xf32>
    tpu.vector_store %arg3[%c0_7, %c1, %c0_8], %9 {strides = array<i32>} : memref<1x4x256xf32, #tpu.memory_space<vmem>>, vector<1x1x256xf32>,
    %c0_9 = arith.constant 0 : index
    %c1_10 = arith.constant 1 : index
    %c0_11 = arith.constant 0 : index
    %10 = vector.load %arg2[%c0_9, %c1_10, %c0_11] : memref<1x4x256xf32, #tpu.memory_space<vmem>>, vector<1x1x256xf32>
    %11 = vector.shape_cast %10 : vector<1x1x256xf32> to vector<256xf32>
    %c0_12 = arith.constant 0 : index
    %c2_13 = arith.constant 2 : index
    %c0_14 = arith.constant 0 : index
    %12 = vector.load %arg3[%c0_12, %c2_13, %c0_14] : memref<1x4x256xf32, #tpu.memory_space<vmem>>, vector<1x1x256xf32>
    %13 = vector.shape_cast %12 : vector<1x1x256xf32> to vector<256xf32>
    %14 = vector.shape_cast %11 : vector<256xf32> to vector<1x1x256xf32>
    tpu.vector_store %arg3[%c0_12, %c2_13, %c0_14], %14 {strides = array<i32>} : memref<1x4x256xf32, #tpu.memory_space<vmem>>, vector<1x1x256xf32>,
    %c0_15 = arith.constant 0 : index
    %c3 = arith.constant 3 : index
    %c0_16 = arith.constant 0 : index
    %15 = vector.load %arg2[%c0_15, %c3, %c0_16] : memref<1x4x256xf32, #tpu.memory_space<vmem>>, vector<1x1x256xf32>
    %16 = vector.shape_cast %15 : vector<1x1x256xf32> to vector<256xf32>
    %c0_17 = arith.constant 0 : index
    %c3_18 = arith.constant 3 : index
    %c0_19 = arith.constant 0 : index
    %17 = vector.load %arg3[%c0_17, %c3_18, %c0_19] : memref<1x4x256xf32, #tpu.memory_space<vmem>>, vector<1x1x256xf32>
    %18 = vector.shape_cast %17 : vector<1x1x256xf32> to vector<256xf32>
    %19 = vector.shape_cast %16 : vector<256xf32> to vector<1x1x256xf32>
    tpu.vector_store %arg3[%c0_17, %c3_18, %c0_19], %19 {strides = array<i32>} : memref<1x4x256xf32, #tpu.memory_space<vmem>>, vector<1x1x256xf32>,
    return
  }
  func.func @transform_0(%arg0: i32, %arg1: i32) -> (i32, i32, i32) {
    %c0_i32 = arith.constant 0 : i32
    %c0_i32_0 = arith.constant 0 : i32
    return %arg0, %c0_i32, %arg1 : i32, i32, i32
  }
  func.func @transform_1(%arg0: i32, %arg1: i32) -> (i32, i32, i32) {
    %c0_i32 = arith.constant 0 : i32
    %c0_i32_0 = arith.constant 0 : i32
    return %arg0, %c0_i32, %arg1 : i32, i32, i32
  }
}

</mosaic_0001>

<llo_original>
// kernel: tpu_custom_call.1
$region0: #{tpu_custom_call.1}
  #allocation0 [shape = 'u32[]', space=smem, size = 0x4, offset = 0x4, fixed_abs, tag = 'smem constant byte address 0x4 - core index']
  #allocation1 [shape = 'u32[144,128]{1,0:T(1,128)}', space=vmem, size = 0x12000, scoped, tag = 'internal scratch']
  %s0 = inlined_call_operand.hbm [shape: f32[2,4,256], index: 0, kind: input, shape index: {}]
  %s1 = inlined_call_operand.hbm [shape: f32[2,4,256], index: 1, kind: output, shape index: {}]
  %s2 = sld [smem:[#allocation0]]
  $region41: #{tpu_custom_call.1} parent=0
    _
  %s4 = ssub.s32 1, %s2
  %s5 = scalar_select 0, %s4, %s2
  $region1: #{tpu_custom_call.1} parent=0
    #allocation2 [shape = 'u8[8192]{0}', space=vmem, size = 0x2000, scoped, tag = 'input window, operand 0']
    #allocation3 [shape = 's32[2]{0}', space=sflag, size = 0x8, scoped, tag = 'scoped memory for tpu_custom_call.1']
    #allocation4 [shape = 's32[2]{0}', space=sflag, size = 0x8, scoped, tag = 'scoped memory for tpu_custom_call.1']
    #allocation5 [shape = 'u8[8192]{0}', space=vmem, size = 0x2000, scoped, tag = 'output window, operand 0']
    %6 = vsyncpa [#allocation3], 0
    %s7 = scalar_lea.sflag [#allocation3], 1
    %8 = vsyncpa %s7, 0
    %9 = vsyncpa [#allocation4], 0
    %s10 = scalar_lea.sflag [#allocation4], 1
    %11 = vsyncpa %s10, 0
    loop: start=0, step=1, limit=4
    $region2: #{tpu_custom_call.1} parent=1 // loop_pre_header
      _
    $region3: #{tpu_custom_call.1} parent=1 // loop_header
      %s13 = sphi 0, %s17
      %p14 = scmp.ge.s32.totalorder %s13, 4
      %s20 = sphi 0, %s32
      %s21 = sphi 0, %s28
      %s22 = sphi 0, %s20
      %s23 = sphi 0, %s21
      %s24 = sphi 0, %s22
      %s25 = sphi 0, %s23
      %s37 = sphi 0, %s39
      %s40 = sphi 0, %s37
      %s41 = sphi 0, %s40
      %s57 = sphi 0, %s41
      %s65 = sphi 0, %s67
      %s68 = sphi 0, %s65
      %s69 = sphi 0, %s68
      %s85 = sphi 0, %s69
    $region4: #{tpu_custom_call.1} parent=1 // loop_header_branch
      %16 = sbr.rel (%p14) target = $region8
    $region5: #{tpu_custom_call.1} parent=1 // loop_body
      %s18 = ssub.s32 %s13, 1
      %s19 = ssub.s32 %s13, 2
      %s26 = sadd.s32 1, %s21
      %p27 = scmp.ge.s32.totalorder %s26, 1
      %s28 = scalar_select %p27, 0, %s26
      %s29 = sadd.s32 1, %s20
      %s30 = scalar_select %p27, %s29, %s20
      %p31 = scmp.ge.s32.totalorder %s30, 2
      %s32 = scalar_select %p31, 0, %s30
      %s33 = ssub.s32 %s20, %s32
      %s34 = ssub.s32 %s21, %s28
      %s35 = sor.u32 %s33, %s34
      %p36 = scmp.eq.s32.totalorder %s35, 0
      %s38 = sadd.s32 %s37, 1
      %s39 = scalar_select %p36, %s37, %s38
      %p42 = pneg %p36
      %p43 = scmp.eq.s32.totalorder %s13, 1
      %p44 = por %p42, %p43
      %p45 = scmp.ne.s32.totalorder %s37, %s40
      %p46 = scmp.eq.s32.totalorder %s13, 0
      %p47 = por %p45, %p46
      %p48 = scmp.ne.s32.totalorder %s37, %s40
      %p49 = scmp.eq.s32.totalorder %s18, 1
      %p50 = por %p48, %p49
      %p51 = scmp.ne.s32.totalorder %s40, %s41
      %p52 = scmp.eq.s32.totalorder %s18, 0
      %p53 = por %p51, %p52
      %p54 = scmp.ne.s32.totalorder %s40, %s41
      %p55 = scmp.eq.s32.totalorder %s19, 1
      %p56 = por %p54, %p55
      %p58 = scmp.ne.s32.totalorder %s41, %s57
      %p59 = scmp.eq.s32.totalorder %s19, 0
      %p60 = por %p58, %p59
      %s61 = ssub.s32 %s20, %s32
      %s62 = ssub.s32 %s21, %s28
      %s63 = sor.u32 %s61, %s62
      %p64 = scmp.eq.s32.totalorder %s63, 0
      %s66 = sadd.s32 %s65, 1
      %s67 = scalar_select %p64, %s65, %s66
      %p70 = pneg %p64
      %p71 = scmp.eq.s32.totalorder %s13, 1
      %p72 = por %p70, %p71
      %p73 = scmp.ne.s32.totalorder %s65, %s68
      %p74 = scmp.eq.s32.totalorder %s13, 0
      %p75 = por %p73, %p74
      %p76 = scmp.ne.s32.totalorder %s65, %s68
      %p77 = scmp.eq.s32.totalorder %s18, 1
      %p78 = por %p76, %p77
      %p79 = scmp.ne.s32.totalorder %s68, %s69
      %p80 = scmp.eq.s32.totalorder %s18, 0
      %p81 = por %p79, %p80
      %p82 = scmp.ne.s32.totalorder %s68, %s69
      %p83 = scmp.eq.s32.totalorder %s19, 1
      %p84 = por %p82, %p83
      %p86 = scmp.ne.s32.totalorder %s69, %s85
      %p87 = scmp.eq.s32.totalorder %s19, 0
      %p88 = por %p86, %p87
      %p89 = scmp.le.s32.totalorder 1, %s13
      %p90 = scmp.lt.s32.totalorder %s13, 3
      %p91 = pnand %p89, %p90
      %p92 = pneg %p91
      // Predicated region
      $region9: #{tpu_custom_call.1} parent=5 // pred_check
        _
      $region10: #{tpu_custom_call.1} parent=5 // pred_check_branch
        %94 = sbr.rel (%p91) target = $region12
      $region11: #{tpu_custom_call.1} parent=5 // pred_region
        %s95 = ssub.s32 %s13, 1
      $region12: #{tpu_custom_call.1} parent=5 // pred_fallthru
        _
      %p96 = scmp.lt.s32.totalorder %s13, 2
      // Predicated region
      $region13: #{tpu_custom_call.1} parent=5 // pred_check
        %p97 = pneg %p96
      $region14: #{tpu_custom_call.1} parent=5 // pred_check_branch
        %99 = sbr.rel (%p97) target = $region16
      $region15: #{tpu_custom_call.1} parent=5 // pred_region
        // Predicated region
        $region17: #{tpu_custom_call.1} parent=15 // pred_check
          %p100 = pneg %p47
        $region18: #{tpu_custom_call.1} parent=15 // pred_check_branch
          %102 = sbr.rel (%p100) target = $region20
        $region19: #{tpu_custom_call.1} parent=15 // pred_region
          %s103 = sand.u32 %s37, 1
          %s104 = scalar_lea.sflag [#allocation3], %s103
          %s105 = sand.u32 %s37, 1
          %s106 = smul.addr %s105, 8
          %s107 = scalar_lea.vmem [#allocation2], %s106
          %s108 = smul.u32 2, %s21
          %s110 = ssub.s32 128, 128
          %111 = vsyncadd %s104, %s110
          %s112 = smul.addr %s20, 2
          %s113 = sadd.s32 %s108, %s112
          %s114 = smul.addr %s113, 64
          %s115 = scalar_lea.hbm %s0, %s114
          %s117 = sshll.u32 %s107, 4
          %s118 = int_to_ptr.vmem [resolvable:$true] %s117
          %120 = dma.hbm_to_vmem [thread:$0]  %s115, 128, %s118, %s104
        $region20: #{tpu_custom_call.1} parent=15 // pred_fallthru
          _
      $region16: #{tpu_custom_call.1} parent=5 // pred_fallthru
        _
      %p121 = scmp.le.s32.totalorder 1, %s13
      %p122 = scmp.lt.s32.totalorder %s13, 3
      %p123 = pnand %p121, %p122
      %p124 = pneg %p123
      // Predicated region
      $region21: #{tpu_custom_call.1} parent=5 // pred_check
        _
      $region22: #{tpu_custom_call.1} parent=5 // pred_check_branch
        %126 = sbr.rel (%p123) target = $region24
      $region23: #{tpu_custom_call.1} parent=5 // pred_region
        %s127 = ssub.s32 %s13, 1
        %s128 = sand.u32 %s40, 1
        %s129 = scalar_lea.sflag [#allocation3], %s128
        %s130 = sand.u32 %s40, 1
        %s131 = smul.addr %s130, 8
        %s132 = scalar_lea.vmem [#allocation2], %s131
        // Predicated region
        $region25: #{tpu_custom_call.1} parent=23 // pred_check
          %p133 = pneg %p53
        $region26: #{tpu_custom_call.1} parent=23 // pred_check_branch
          %135 = sbr.rel (%p133) target = $region28
        $region27: #{tpu_custom_call.1} parent=23 // pred_region
          %136 = dma.done %s129, 128
        $region28: #{tpu_custom_call.1} parent=23 // pred_fallthru
          _
        %s137 = sand.u32 %s40, 1
        %s138 = scalar_lea.sflag [#allocation3], %s137
        %s139 = sand.u32 %s40, 1
        %s140 = smul.addr %s139, 8
        %s141 = scalar_lea.vmem [#allocation2], %s140
        %p142 = pneg %p53
        %p143 = pneg %p50
        %p144 = pneg %p81
        %p145 = pneg %p78
        %s146 = sand.u32 %s68, 1
        %s147 = scalar_lea.sflag [#allocation4], %s146
        %s148 = sand.u32 %s68, 1
        %s149 = smul.addr %s148, 8
        %s150 = scalar_lea.vmem [#allocation5], %s149
        %s151 = smul.u32 2, %s23
        %s152 = smul.u32 2, %s23
        %v153 = vld [vmem:[%s132] ss:$4 sm:$0x3]
        %v154 = vlaneseq
        %vm155 = vcmp.ge.s32.totalorder %v154, 0
        %vm156 = vcmp.lt.s32.totalorder %v154, 256
        %vm157 = vmand %vm155, %vm156
        %158 = vst.msk [vmem:[%s150] ss:$4 sm:$0x3] %vm157, %v153
        %s159 = scalar_lea.vmem %s132, 2 [#allocation2]
        %v160 = vld [vmem:[%s159] ss:$4 sm:$0x3]
        %s161 = scalar_lea.vmem %s150, 1 [#allocation5]
        %162 = vst.msk [vmem:[%s161] ss:$4 sm:$0x3] %vm157, %v160
        %s163 = scalar_lea.vmem %s132, 1 [#allocation2]
        %v164 = vld [vmem:[%s163] ss:$4 sm:$0x3]
        %s165 = scalar_lea.vmem %s150, 2 [#allocation5]
        %166 = vst.msk [vmem:[%s165] ss:$4 sm:$0x3] %vm157, %v164
        %s167 = scalar_lea.vmem %s132, 3 [#allocation2]
        %v168 = vld [vmem:[%s167] ss:$4 sm:$0x3]
        %s169 = scalar_lea.vmem %s150, 3 [#allocation5]
        %170 = vst.msk [vmem:[%s169] ss:$4 sm:$0x3] %vm157, %v168
        %s171 = sand.u32 %s68, 1
        %s172 = scalar_lea.sflag [#allocation4], %s171
        %s173 = sand.u32 %s68, 1
        %s174 = smul.addr %s173, 8
        %s175 = scalar_lea.vmem [#allocation5], %s174
        // Predicated region
        $region29: #{tpu_custom_call.1} parent=23 // pred_check
          %p176 = pneg %p78
        $region30: #{tpu_custom_call.1} parent=23 // pred_check_branch
          %178 = sbr.rel (%p176) target = $region32
        $region31: #{tpu_custom_call.1} parent=23 // pred_region
          %s179 = smul.u32 2, %s23
          %s181 = ssub.s32 128, 128
          %182 = vsyncadd %s172, %s181
          %s183 = smul.addr %s22, 2
          %s184 = sadd.s32 %s179, %s183
          %s185 = smul.addr %s184, 64
          %s186 = scalar_lea.hbm %s1, %s185
          %s188 = sshll.u32 %s175, 4
          %s189 = int_to_ptr.vmem [resolvable:$true] %s188
          %191 = dma.vmem_to_hbm [thread:$0]  %s189, 128, %s186, %s172
        $region32: #{tpu_custom_call.1} parent=23 // pred_fallthru
          _
      $region24: #{tpu_custom_call.1} parent=5 // pred_fallthru
        _
      %p192 = scmp.le.s32.totalorder 2, %s13
      // Predicated region
      $region33: #{tpu_custom_call.1} parent=5 // pred_check
        %p193 = pneg %p192
      $region34: #{tpu_custom_call.1} parent=5 // pred_check_branch
        %195 = sbr.rel (%p193) target = $region36
      $region35: #{tpu_custom_call.1} parent=5 // pred_region
        %s196 = ssub.s32 %s13, 2
        // Predicated region
        $region37: #{tpu_custom_call.1} parent=35 // pred_check
          %p197 = pneg %p84
        $region38: #{tpu_custom_call.1} parent=35 // pred_check_branch
          %199 = sbr.rel (%p197) target = $region40
        $region39: #{tpu_custom_call.1} parent=35 // pred_region
          %s200 = sand.u32 %s69, 1
          %s201 = scalar_lea.sflag [#allocation4], %s200
          %s202 = sand.u32 %s69, 1
          %s203 = smul.addr %s202, 8
          %s204 = scalar_lea.vmem [#allocation5], %s203
          %205 = dma.done %s201, 128
        $region40: #{tpu_custom_call.1} parent=35 // pred_fallthru
          _
      $region36: #{tpu_custom_call.1} parent=5 // pred_fallthru
        _
    $region6: #{tpu_custom_call.1} parent=1 // loop_footer
      %s17 = sadd.s32 1, %s13
    $region7: #{tpu_custom_call.1} parent=1 // loop_footer_branch
      %12 = sbr.rel target = $region3
    $region8: #{tpu_custom_call.1} parent=1 // loop_exit
      _
    %206 = vsyncpa [#allocation3], 1
    %s207 = scalar_lea.sflag [#allocation3], 1
    %208 = vsyncpa %s207, 1
    %209 = vsyncpa [#allocation4], 1
    %s210 = scalar_lea.sflag [#allocation4], 1
    %211 = vsyncpa %s210, 1

</llo_original>
